<compile_context>
chip_gen: v5e
topology: v5e:2x2
jax: 0.10.0
libtpu: 0.0.40
codegen_flags: <defaults>
</compile_context>

<pallas_src>
import functools

import numpy as np
import jax
import jax.numpy as jnp
from jax.experimental import pallas as pl
from jax.experimental.pallas import tpu as pltpu

LOG_EPS = -64.0
EPS = float(np.exp(np.float32(LOG_EPS)))
NEG_BIG = -1e30  # additive lane mask for logsumexp


def leaf_interval(depth, start_idx=0):
    if depth == 0:
        return [start_idx], [start_idx], [], start_idx
    l_l, l_r, l_adj, last = leaf_interval(depth - 1, start_idx)
    my_idx = last + 1
    r_l, r_r, r_adj, last = leaf_interval(depth - 1, my_idx + 1)
    return ([my_idx] + l_l, [my_idx] + r_r,
            [(l, r) for l in l_r for r in r_l] + l_adj + r_adj, last)


def _round_up(x, m):
    return (x + m - 1) // m * m


def ctreec_kernel(ext_ref, tl_ref, start_ref, outmask_ref, endmask_ref, M_ref,
                  acc_ref, prev_ref, *, L, TL):
    """One (batch-block, time-block) grid step: TL recurrence steps in-kernel."""
    tb = pl.program_id(1)  # time-block index (innermost, "arbitrary")

    @pl.when(tb == 0)
    def _():
        acc_ref[...] = jnp.zeros_like(acc_ref)
        prev_ref[...] = jnp.broadcast_to(start_ref[...], prev_ref.shape)

    TB, Np = prev_ref.shape
    tl = tl_ref[...]                                           # (TB, 128) int32
    # hoist broadcasts out of the loop
    out_mask = jnp.broadcast_to(outmask_ref[...], (TB, Np))    # 0 on out nodes
    end_mask = jnp.broadcast_to(endmask_ref[...], (TB, Np))    # 0 on end nodes
    M = M_ref[...]                                             # (Np, Np) transition
    t0 = tb * TL

    def step(i, carry):
        prev, acc = carry
        t = t0 + i
        # log_safe(prev)
        log_prev = jnp.where(prev < EPS, LOG_EPS, jnp.log(jnp.maximum(prev, EPS)))
        log_curr = log_prev + ext_ref[i]                       # (TB, Np)

        # lane-masked logsumexp over out-unique nodes -> log_C
        lo = log_curr + out_mask
        m = jnp.max(lo, axis=-1, keepdims=True)
        log_C = m + jnp.log(jnp.sum(jnp.exp(lo - m), axis=-1, keepdims=True))

        # lane-masked logsumexp over end nodes -> end_vals
        le = log_curr + end_mask
        me = jnp.max(le, axis=-1, keepdims=True)
        end_vals = me + jnp.log(jnp.sum(jnp.exp(le - me), axis=-1, keepdims=True))

        is_end = jnp.logical_and(t < L, tl == (t + 1))
        is_mid = jnp.logical_and(tl > (t + 1), t < L - 1)
        acc = acc + jnp.where(is_end, end_vals, 0.0)
        acc = acc + jnp.where(is_mid, log_C, 0.0)

        # exp_safe(log_curr - log_C) on out nodes, then one MXU matmul with the
        # (Np, Np) transition matrix (zero rows annihilate masked / padded lanes).
        p_full = jnp.exp(jnp.maximum(lo - log_C, LOG_EPS))
        new_prev = jnp.dot(p_full, M, preferred_element_type=jnp.float32)
        keep = (t < (L - 1)).astype(jnp.float32)               # skip last-step update
        prev = keep * new_prev + (1.0 - keep) * prev
        return prev, acc

    prev, acc = jax.lax.fori_loop(
        0, TL, step, (prev_ref[...], acc_ref[...]), unroll=(TL <= 16))
    prev_ref[...] = prev
    acc_ref[...] = acc


class CTreeCLoss:
    def __init__(self, depth):
        start, end, adj, _ = leaf_interval(depth)
        n_nodes = 2 ** (depth + 1) - 1
        out_idx = np.array([i for i, _ in adj], dtype=np.int64)
        in_idx = np.array([j for _, j in adj], dtype=np.int64)
        out_uniq, out_inv = np.unique(out_idx, return_inverse=True)
        n_adj = len(adj)
        in_acc_mat = np.zeros((n_adj, n_nodes), np.float32)
        in_acc_mat[np.arange(n_adj), in_idx] = 1.0

        self.depth = depth
        self.n_nodes = n_nodes
        self.Np = _round_up(n_nodes, 128)

        # M_full[n, j] = number of tree edges n -> j (the transition matrix),
        # zero rows for non-out / padded nodes.  This fuses the out_uniq gather,
        # the out_uniq_inv expansion and in_acc_mat into a single matmul operand.
        M_full = np.zeros((self.Np, self.Np), np.float32)
        np.add.at(M_full, (out_idx, in_idx), 1.0)

        out_mask = np.full((1, self.Np), NEG_BIG, np.float32)
        out_mask[0, out_uniq] = 0.0
        end_mask = np.full((1, self.Np), NEG_BIG, np.float32)
        end_mask[0, np.array(end)] = 0.0
        startv = np.zeros((1, self.Np), np.float32)
        startv[0, np.array(start)] = 1.0

        self.M_full = jnp.asarray(M_full)
        self.out_mask = jnp.asarray(out_mask)
        self.end_mask = jnp.asarray(end_mask)
        self.startv = jnp.asarray(startv)

        # kept for the numpy reference implementation
        self.start = np.array(start, np.int64)
        self.end = np.array(end, np.int64)
        self.out_uniq = out_uniq
        self.out_inv = out_inv
        self.in_acc_mat = in_acc_mat

    def forward(self, log_probs, targets, target_lengths):
        N, B, V = log_probs.shape
        L = targets.shape[0]
        assert N == self.n_nodes

        # extract_label_log_probs directly into (L, B, N) lane-dense layout:
        # ext[l, b, n] = log_probs[n, b, targets[l, b]]
        lp = jnp.transpose(log_probs, (1, 2, 0)).astype(jnp.float32)       # (B, V, N)
        ext = lp[jnp.arange(B)[None, :], targets.astype(jnp.int32), :]     # (L, B, N)

        TL = min(L, 128)                       # time steps per grid iteration
        L_pad = _round_up(L, TL)
        Bp = _round_up(max(B, 1), 8)
        TB = min(Bp, 256)                      # batch rows per block (MXU rows)
        Bp2 = _round_up(Bp, TB)

        ext_p = jnp.zeros((L_pad, Bp2, self.Np), jnp.float32).at[:L, :B, :N].set(ext)
        tl_p = jnp.zeros((Bp2,), jnp.int32).at[:B].set(target_lengths.astype(jnp.int32))
        tl2 = jnp.broadcast_to(tl_p[:, None], (Bp2, 128)).astype(jnp.int32)

        num_b = Bp2 // TB
        num_t = L_pad // TL

        # VMEM budget: double-buffered inputs + output + prev scratch, with headroom.
        vmem_bytes = 4 * (2 * (TL * TB * self.Np + TB * 128 + 3 * self.Np
                               + self.Np * self.Np + TB * 128) + TB * self.Np)
        vmem_limit = int(min(64 * 1024 * 1024,
                             max(2 * vmem_bytes, 16 * 1024 * 1024)))

        kernel = functools.partial(ctreec_kernel, L=L, TL=TL)

        acc = pl.pallas_call(
            kernel,
            out_shape=jax.ShapeDtypeStruct((Bp2, 128), jnp.float32),
            grid_spec=pltpu.PrefetchScalarGridSpec(
                num_scalar_prefetch=0,
                grid=(num_b, num_t),
                in_specs=[
                    pl.BlockSpec((TL, TB, self.Np), lambda b, t: (t, b, 0)),
                    pl.BlockSpec((TB, 128), lambda b, t: (b, 0)),
                    pl.BlockSpec((1, self.Np), lambda b, t: (0, 0)),
                    pl.BlockSpec((1, self.Np), lambda b, t: (0, 0)),
                    pl.BlockSpec((1, self.Np), lambda b, t: (0, 0)),
                    pl.BlockSpec((self.Np, self.Np), lambda b, t: (0, 0)),
                ],
                out_specs=pl.BlockSpec((TB, 128), lambda b, t: (b, 0)),
                scratch_shapes=[pltpu.VMEM((TB, self.Np), jnp.float32)],
            ),
            compiler_params=pltpu.CompilerParams(
                dimension_semantics=("parallel", "arbitrary"),
                vmem_limit_bytes=vmem_limit),
        )(ext_p, tl2, self.startv, self.out_mask, self.end_mask, self.M_full)

        return -acc[:B, 0]

    def reference(self, log_probs, targets, target_lengths):
        """Pure numpy mirror of forward_ctreec for correctness checking."""
        N, B, V = log_probs.shape
        L = targets.shape[0]
        extracted = np.empty((L, B, N), np.float32)
        for l in range(L):
            for b in range(B):
                extracted[l, b, :] = log_probs[:, b, targets[l, b]]
        acc = np.zeros(B, np.float32)
        prev = np.zeros((B, N), np.float32)
        prev[:, self.start] = 1.0
        for t in range(L):
            log_prev = np.where(prev < EPS, LOG_EPS,
                                np.log(np.maximum(prev, EPS))).astype(np.float32)
            log_curr = log_prev + extracted[t]
            log_out = log_curr[:, self.out_uniq]
            m = log_out.max(-1, keepdims=True)
            log_C = m + np.log(np.exp(log_out - m).sum(-1, keepdims=True))
            outgoing = np.exp(np.maximum(log_out - log_C, LOG_EPS))[:, self.out_inv]
            end = (t + 1 == target_lengths)
            end_sel = log_curr[:, self.end]
            me = end_sel.max(-1, keepdims=True)
            end_vals = (me + np.log(np.exp(end_sel - me).sum(-1, keepdims=True)))[:, 0]
            acc = acc + np.where(end, end_vals, 0.0).astype(np.float32)
            if t < L - 1:
                mid = (t + 1 < target_lengths)
                acc = acc + np.where(mid, log_C[:, 0], 0.0).astype(np.float32)
                prev = (outgoing @ self.in_acc_mat).astype(np.float32)
        return (-acc).astype(np.float32)


if __name__ == "__main__":
    depth = 3
    B, V, L = 4, 11, 6
    loss = CTreeCLoss(depth)
    N = loss.n_nodes  # 15 tree nodes for depth=3

    key = jax.random.PRNGKey(0)
    k1, k2 = jax.random.split(key)
    logits = jax.random.normal(k1, (N, B, V), jnp.float32)
    log_probs = jax.nn.log_softmax(logits, axis=-1)              # (N, B, V)
    targets = jax.random.randint(k2, (L, B), 0, V, dtype=jnp.int32)  # (L, B)
    target_lengths = jnp.array([6, 4, 2, 5], jnp.int32)          # (B,)

    out = loss.forward(log_probs, targets, target_lengths)
    out = jax.block_until_ready(out)

    ref = loss.reference(np.asarray(log_probs), np.asarray(targets),
                         np.asarray(target_lengths))
    assert out.shape == (B,)
    assert np.allclose(np.asarray(out), ref, rtol=1e-3, atol=1e-2), (np.asarray(out), ref)
    print("KERNEL_OK")
</pallas_src>

<mosaic_0001>
module attributes {stable_mosaic.version = 11 : i64} {
  func.func @ctreec_kernel(%arg0: i32, %arg1: i32, %arg2: memref<6x8x128xf32, #tpu.memory_space<vmem>>, %arg3: memref<8x128xi32, #tpu.memory_space<vmem>>, %arg4: memref<1x128xf32, #tpu.memory_space<vmem>>, %arg5: memref<1x128xf32, #tpu.memory_space<vmem>>, %arg6: memref<1x128xf32, #tpu.memory_space<vmem>>, %arg7: memref<128x128xf32, #tpu.memory_space<vmem>>, %arg8: memref<8x128xf32, #tpu.memory_space<vmem>>, %arg9: memref<8x128xf32, #tpu.memory_space<vmem>>) attributes {dimension_semantics = [#tpu.dimension_semantics<parallel>, #tpu.dimension_semantics<arbitrary>], iteration_bounds = array<i64: 1, 1>, scalar_prefetch = 0 : i64, scratch_operands = 1 : i64, tpu.core_type = #tpu.core_type<tc>, window_params = [{transform_indices = @transform_0, window_bounds = array<i64: 6, 8, 128>}, {transform_indices = @transform_1, window_bounds = array<i64: 8, 128>}, {pipeline_mode = #tpu.pipeline_mode<synchronous>, transform_indices = @transform_2, window_bounds = array<i64: 1, 128>}, {pipeline_mode = #tpu.pipeline_mode<synchronous>, transform_indices = @transform_3, window_bounds = array<i64: 1, 128>}, {pipeline_mode = #tpu.pipeline_mode<synchronous>, transform_indices = @transform_4, window_bounds = array<i64: 1, 128>}, {pipeline_mode = #tpu.pipeline_mode<synchronous>, transform_indices = @transform_5, window_bounds = array<i64: 128, 128>}, {transform_indices = @transform_6, window_bounds = array<i64: 8, 128>}]} {
    %c0_i32 = arith.constant 0 : i32
    %0 = arith.cmpi eq, %arg1, %c0_i32 : i32
    %1 = arith.extui %0 : i1 to i32
    %c0_i32_0 = arith.constant 0 : i32
    %2 = arith.cmpi ne, %1, %c0_i32_0 : i32
    scf.if %2 {
      %cst_131 = arith.constant 0.000000e+00 : f32
      %430 = vector.broadcast %cst_131 : f32 to vector<8x128xf32>
      %c0_132 = arith.constant 0 : index
      %c0_133 = arith.constant 0 : index
      %431 = vector.load %arg8[%c0_132, %c0_133] : memref<8x128xf32, #tpu.memory_space<vmem>>, vector<8x128xf32>
      tpu.vector_store %arg8[%c0_132, %c0_133], %430 {strides = array<i32>} : memref<8x128xf32, #tpu.memory_space<vmem>>, vector<8x128xf32>,
      %c0_134 = arith.constant 0 : index
      %c0_135 = arith.constant 0 : index
      %432 = vector.load %arg4[%c0_134, %c0_135] : memref<1x128xf32, #tpu.memory_space<vmem>>, vector<1x128xf32>
      %433 = vector.shape_cast %432 : vector<1x128xf32> to vector<1x128xf32>
      %434 = vector.broadcast %433 : vector<1x128xf32> to vector<8x128xf32>
      %c0_136 = arith.constant 0 : index
      %c0_137 = arith.constant 0 : index
      %435 = vector.load %arg9[%c0_136, %c0_137] : memref<8x128xf32, #tpu.memory_space<vmem>>, vector<8x128xf32>
      tpu.vector_store %arg9[%c0_136, %c0_137], %434 {strides = array<i32>} : memref<8x128xf32, #tpu.memory_space<vmem>>, vector<8x128xf32>,
    } else {
    }
    %c0 = arith.constant 0 : index
    %c0_1 = arith.constant 0 : index
    %3 = vector.load %arg3[%c0, %c0_1] : memref<8x128xi32, #tpu.memory_space<vmem>>, vector<8x128xi32>
    %c0_2 = arith.constant 0 : index
    %c0_3 = arith.constant 0 : index
    %4 = vector.load %arg5[%c0_2, %c0_3] : memref<1x128xf32, #tpu.memory_space<vmem>>, vector<1x128xf32>
    %5 = vector.shape_cast %4 : vector<1x128xf32> to vector<1x128xf32>
    %6 = vector.broadcast %5 : vector<1x128xf32> to vector<8x128xf32>
    %c0_4 = arith.constant 0 : index
    %c0_5 = arith.constant 0 : index
    %7 = vector.load %arg6[%c0_4, %c0_5] : memref<1x128xf32, #tpu.memory_space<vmem>>, vector<1x128xf32>
    %8 = vector.shape_cast %7 : vector<1x128xf32> to vector<1x128xf32>
    %9 = vector.broadcast %8 : vector<1x128xf32> to vector<8x128xf32>
    %c0_6 = arith.constant 0 : index
    %c0_7 = arith.constant 0 : index
    %10 = vector.load %arg7[%c0_6, %c0_7] : memref<128x128xf32, #tpu.memory_space<vmem>>, vector<128x128xf32>
    %c6_i32 = arith.constant 6 : i32
    %11 = arith.muli %arg1, %c6_i32 : i32
    %c0_8 = arith.constant 0 : index
    %c0_9 = arith.constant 0 : index
    %12 = vector.load %arg9[%c0_8, %c0_9] : memref<8x128xf32, #tpu.memory_space<vmem>>, vector<8x128xf32>
    %c0_10 = arith.constant 0 : index
    %c0_11 = arith.constant 0 : index
    %13 = vector.load %arg8[%c0_10, %c0_11] : memref<8x128xf32, #tpu.memory_space<vmem>>, vector<8x128xf32>
    %c0_i32_12 = arith.constant 0 : i32
    %14 = arith.addi %11, %c0_i32_12 : i32
    %cst = arith.constant 1.60381082E-28 : f32
    %15 = vector.broadcast %cst : f32 to vector<8x128xf32>
    %16 = arith.cmpf olt, %12, %15 : vector<8x128xf32>
    %cst_13 = arith.constant 1.60381082E-28 : f32
    %17 = vector.broadcast %cst_13 : f32 to vector<8x128xf32>
    %18 = arith.maximumf %12, %17 : vector<8x128xf32>
    %19 = math.log %18 : vector<8x128xf32>
    %cst_14 = arith.constant -6.400000e+01 : f32
    %20 = vector.broadcast %cst_14 : f32 to vector<8x128xf32>
    %21 = arith.select %16, %20, %19 : vector<8x128xi1>, vector<8x128xf32>
    %22 = arith.index_cast %c0_i32_12 : i32 to index
    %c0_15 = arith.constant 0 : index
    %c0_16 = arith.constant 0 : index
    %23 = vector.load %arg2[%22, %c0_15, %c0_16] : memref<6x8x128xf32, #tpu.memory_space<vmem>>, vector<1x8x128xf32>
    %24 = vector.shape_cast %23 : vector<1x8x128xf32> to vector<8x128xf32>
    %25 = arith.addf %21, %24 : vector<8x128xf32>
    %26 = arith.addf %25, %6 : vector<8x128xf32>
    %cst_17 = arith.constant dense<0xFF800000> : vector<8xf32>
    %27 = vector.multi_reduction <maximumf>, %26, %cst_17 [1] : vector<8x128xf32> to vector<8xf32>
    %28 = vector.shape_cast %27 : vector<8xf32> to vector<8x1xf32>
    %29 = vector.broadcast %28 : vector<8x1xf32> to vector<8x128xf32>
    %30 = arith.subf %26, %29 : vector<8x128xf32>
    %31 = math.exp %30 : vector<8x128xf32>
    %cst_18 = arith.constant dense<0.000000e+00> : vector<8xf32>
    %32 = vector.multi_reduction <add>, %31, %cst_18 [1] : vector<8x128xf32> to vector<8xf32>
    %33 = vector.shape_cast %32 : vector<8xf32> to vector<8x1xf32>
    %34 = math.log %33 : vector<8x1xf32>
    %35 = arith.addf %28, %34 : vector<8x1xf32>
    %36 = arith.addf %25, %9 : vector<8x128xf32>
    %cst_19 = arith.constant dense<0xFF800000> : vector<8xf32>
    %37 = vector.multi_reduction <maximumf>, %36, %cst_19 [1] : vector<8x128xf32> to vector<8xf32>
    %38 = vector.shape_cast %37 : vector<8xf32> to vector<8x1xf32>
    %39 = vector.broadcast %38 : vector<8x1xf32> to vector<8x128xf32>
    %40 = arith.subf %36, %39 : vector<8x128xf32>
    %41 = math.exp %40 : vector<8x128xf32>
    %cst_20 = arith.constant dense<0.000000e+00> : vector<8xf32>
    %42 = vector.multi_reduction <add>, %41, %cst_20 [1] : vector<8x128xf32> to vector<8xf32>
    %43 = vector.shape_cast %42 : vector<8xf32> to vector<8x1xf32>
    %44 = math.log %43 : vector<8x1xf32>
    %45 = arith.addf %38, %44 : vector<8x1xf32>
    %c6_i32_21 = arith.constant 6 : i32
    %46 = arith.cmpi slt, %14, %c6_i32_21 : i32
    %c1_i32 = arith.constant 1 : i32
    %47 = arith.addi %14, %c1_i32 : i32
    %48 = vector.broadcast %47 : i32 to vector<8x128xi32>
    %49 = arith.cmpi eq, %3, %48 : vector<8x128xi32>
    %50 = vector.broadcast %46 : i1 to vector<8x128xi1>
    %51 = arith.andi %50, %49 : vector<8x128xi1>
    %c1_i32_22 = arith.constant 1 : i32
    %52 = arith.addi %14, %c1_i32_22 : i32
    %53 = vector.broadcast %52 : i32 to vector<8x128xi32>
    %54 = arith.cmpi sgt, %3, %53 : vector<8x128xi32>
    %c5_i32 = arith.constant 5 : i32
    %55 = arith.cmpi slt, %14, %c5_i32 : i32
    %56 = vector.broadcast %55 : i1 to vector<8x128xi1>
    %57 = arith.andi %54, %56 : vector<8x128xi1>
    %cst_23 = arith.constant 0.000000e+00 : f32
    %58 = vector.shape_cast %45 : vector<8x1xf32> to vector<8x1xf32>
    %59 = vector.broadcast %58 : vector<8x1xf32> to vector<8x128xf32>
    %60 = vector.broadcast %cst_23 : f32 to vector<8x128xf32>
    %61 = arith.select %51, %59, %60 : vector<8x128xi1>, vector<8x128xf32>
    %62 = arith.addf %13, %61 : vector<8x128xf32>
    %cst_24 = arith.constant 0.000000e+00 : f32
    %63 = vector.shape_cast %35 : vector<8x1xf32> to vector<8x1xf32>
    %64 = vector.broadcast %63 : vector<8x1xf32> to vector<8x128xf32>
    %65 = vector.broadcast %cst_24 : f32 to vector<8x128xf32>
    %66 = arith.select %57, %64, %65 : vector<8x128xi1>, vector<8x128xf32>
    %67 = arith.addf %62, %66 : vector<8x128xf32>
    %68 = vector.broadcast %35 : vector<8x1xf32> to vector<8x128xf32>
    %69 = arith.subf %26, %68 : vector<8x128xf32>
    %cst_25 = arith.constant -6.400000e+01 : f32
    %70 = vector.broadcast %cst_25 : f32 to vector<8x128xf32>
    %71 = arith.maximumf %69, %70 : vector<8x128xf32>
    %72 = math.exp %71 : vector<8x128xf32>
    %cst_26 = arith.constant dense<0.000000e+00> : vector<8x128xf32>
    %73 = tpu.matmul %72, %10, %cst_26 {dimension_numbers = #tpu.dot_dimension_numbers<[1], [0], [0], [1], [0, 0, 1, 1], [], []>} : vector<8x128xf32>, vector<128x128xf32>, vector<8x128xf32> -> vector<8x128xf32>
    %c5_i32_27 = arith.constant 5 : i32
    %74 = arith.cmpi slt, %14, %c5_i32_27 : i32
    %75 = arith.extui %74 : i1 to i32
    %76 = arith.sitofp %75 : i32 to f32
    %77 = vector.broadcast %76 : f32 to vector<8x128xf32>
    %78 = arith.mulf %77, %73 : vector<8x128xf32>
    %cst_28 = arith.constant 1.000000e+00 : f32
    %79 = arith.subf %cst_28, %76 : f32
    %80 = vector.broadcast %79 : f32 to vector<8x128xf32>
    %81 = arith.mulf %80, %12 : vector<8x128xf32>
    %82 = arith.addf %78, %81 : vector<8x128xf32>
    %c1_i32_29 = arith.constant 1 : i32
    %83 = arith.addi %11, %c1_i32_29 : i32
    %cst_30 = arith.constant 1.60381082E-28 : f32
    %84 = vector.broadcast %cst_30 : f32 to vector<8x128xf32>
    %85 = arith.cmpf olt, %82, %84 : vector<8x128xf32>
    %cst_31 = arith.constant 1.60381082E-28 : f32
    %86 = vector.broadcast %cst_31 : f32 to vector<8x128xf32>
    %87 = arith.maximumf %82, %86 : vector<8x128xf32>
    %88 = math.log %87 : vector<8x128xf32>
    %cst_32 = arith.constant -6.400000e+01 : f32
    %89 = vector.broadcast %cst_32 : f32 to vector<8x128xf32>
    %90 = arith.select %85, %89, %88 : vector<8x128xi1>, vector<8x128xf32>
    %91 = arith.index_cast %c1_i32_29 : i32 to index
    %c0_33 = arith.constant 0 : index
    %c0_34 = arith.constant 0 : index
    %92 = vector.load %arg2[%91, %c0_33, %c0_34] : memref<6x8x128xf32, #tpu.memory_space<vmem>>, vector<1x8x128xf32>
    %93 = vector.shape_cast %92 : vector<1x8x128xf32> to vector<8x128xf32>
    %94 = arith.addf %90, %93 : vector<8x128xf32>
    %95 = arith.addf %94, %6 : vector<8x128xf32>
    %cst_35 = arith.constant dense<0xFF800000> : vector<8xf32>
    %96 = vector.multi_reduction <maximumf>, %95, %cst_35 [1] : vector<8x128xf32> to vector<8xf32>
    %97 = vector.shape_cast %96 : vector<8xf32> to vector<8x1xf32>
    %98 = vector.broadcast %97 : vector<8x1xf32> to vector<8x128xf32>
    %99 = arith.subf %95, %98 : vector<8x128xf32>
    %100 = math.exp %99 : vector<8x128xf32>
    %cst_36 = arith.constant dense<0.000000e+00> : vector<8xf32>
    %101 = vector.multi_reduction <add>, %100, %cst_36 [1] : vector<8x128xf32> to vector<8xf32>
    %102 = vector.shape_cast %101 : vector<8xf32> to vector<8x1xf32>
    %103 = math.log %102 : vector<8x1xf32>
    %104 = arith.addf %97, %103 : vector<8x1xf32>
    %105 = arith.addf %94, %9 : vector<8x128xf32>
    %cst_37 = arith.constant dense<0xFF800000> : vector<8xf32>
    %106 = vector.multi_reduction <maximumf>, %105, %cst_37 [1] : vector<8x128xf32> to vector<8xf32>
    %107 = vector.shape_cast %106 : vector<8xf32> to vector<8x1xf32>
    %108 = vector.broadcast %107 : vector<8x1xf32> to vector<8x128xf32>
    %109 = arith.subf %105, %108 : vector<8x128xf32>
    %110 = math.exp %109 : vector<8x128xf32>
    %cst_38 = arith.constant dense<0.000000e+00> : vector<8xf32>
    %111 = vector.multi_reduction <add>, %110, %cst_38 [1] : vector<8x128xf32> to vector<8xf32>
    %112 = vector.shape_cast %111 : vector<8xf32> to vector<8x1xf32>
    %113 = math.log %112 : vector<8x1xf32>
    %114 = arith.addf %107, %113 : vector<8x1xf32>
    %c6_i32_39 = arith.constant 6 : i32
    %115 = arith.cmpi slt, %83, %c6_i32_39 : i32
    %c1_i32_40 = arith.constant 1 : i32
    %116 = arith.addi %83, %c1_i32_40 : i32
    %117 = vector.broadcast %116 : i32 to vector<8x128xi32>
    %118 = arith.cmpi eq, %3, %117 : vector<8x128xi32>
    %119 = vector.broadcast %115 : i1 to vector<8x128xi1>
    %120 = arith.andi %119, %118 : vector<8x128xi1>
    %c1_i32_41 = arith.constant 1 : i32
    %121 = arith.addi %83, %c1_i32_41 : i32
    %122 = vector.broadcast %121 : i32 to vector<8x128xi32>
    %123 = arith.cmpi sgt, %3, %122 : vector<8x128xi32>
    %c5_i32_42 = arith.constant 5 : i32
    %124 = arith.cmpi slt, %83, %c5_i32_42 : i32
    %125 = vector.broadcast %124 : i1 to vector<8x128xi1>
    %126 = arith.andi %123, %125 : vector<8x128xi1>
    %cst_43 = arith.constant 0.000000e+00 : f32
    %127 = vector.shape_cast %114 : vector<8x1xf32> to vector<8x1xf32>
    %128 = vector.broadcast %127 : vector<8x1xf32> to vector<8x128xf32>
    %129 = vector.broadcast %cst_43 : f32 to vector<8x128xf32>
    %130 = arith.select %120, %128, %129 : vector<8x128xi1>, vector<8x128xf32>
    %131 = arith.addf %67, %130 : vector<8x128xf32>
    %cst_44 = arith.constant 0.000000e+00 : f32
    %132 = vector.shape_cast %104 : vector<8x1xf32> to vector<8x1xf32>
    %133 = vector.broadcast %132 : vector<8x1xf32> to vector<8x128xf32>
    %134 = vector.broadcast %cst_44 : f32 to vector<8x128xf32>
    %135 = arith.select %126, %133, %134 : vector<8x128xi1>, vector<8x128xf32>
    %136 = arith.addf %131, %135 : vector<8x128xf32>
    %137 = vector.broadcast %104 : vector<8x1xf32> to vector<8x128xf32>
    %138 = arith.subf %95, %137 : vector<8x128xf32>
    %cst_45 = arith.constant -6.400000e+01 : f32
    %139 = vector.broadcast %cst_45 : f32 to vector<8x128xf32>
    %140 = arith.maximumf %138, %139 : vector<8x128xf32>
    %141 = math.exp %140 : vector<8x128xf32>
    %cst_46 = arith.constant dense<0.000000e+00> : vector<8x128xf32>
    %142 = tpu.matmul %141, %10, %cst_46 {dimension_numbers = #tpu.dot_dimension_numbers<[1], [0], [0], [1], [0, 0, 1, 1], [], []>} : vector<8x128xf32>, vector<128x128xf32>, vector<8x128xf32> -> vector<8x128xf32>
    %c5_i32_47 = arith.constant 5 : i32
    %143 = arith.cmpi slt, %83, %c5_i32_47 : i32
    %144 = arith.extui %143 : i1 to i32
    %145 = arith.sitofp %144 : i32 to f32
    %146 = vector.broadcast %145 : f32 to vector<8x128xf32>
    %147 = arith.mulf %146, %142 : vector<8x128xf32>
    %cst_48 = arith.constant 1.000000e+00 : f32
    %148 = arith.subf %cst_48, %145 : f32
    %149 = vector.broadcast %148 : f32 to vector<8x128xf32>
    %150 = arith.mulf %149, %82 : vector<8x128xf32>
    %151 = arith.addf %147, %150 : vector<8x128xf32>
    %c2_i32 = arith.constant 2 : i32
    %152 = arith.addi %11, %c2_i32 : i32
    %cst_49 = arith.constant 1.60381082E-28 : f32
    %153 = vector.broadcast %cst_49 : f32 to vector<8x128xf32>
    %154 = arith.cmpf olt, %151, %153 : vector<8x128xf32>
    %cst_50 = arith.constant 1.60381082E-28 : f32
    %155 = vector.broadcast %cst_50 : f32 to vector<8x128xf32>
    %156 = arith.maximumf %151, %155 : vector<8x128xf32>
    %157 = math.log %156 : vector<8x128xf32>
    %cst_51 = arith.constant -6.400000e+01 : f32
    %158 = vector.broadcast %cst_51 : f32 to vector<8x128xf32>
    %159 = arith.select %154, %158, %157 : vector<8x128xi1>, vector<8x128xf32>
    %160 = arith.index_cast %c2_i32 : i32 to index
    %c0_52 = arith.constant 0 : index
    %c0_53 = arith.constant 0 : index
    %161 = vector.load %arg2[%160, %c0_52, %c0_53] : memref<6x8x128xf32, #tpu.memory_space<vmem>>, vector<1x8x128xf32>
    %162 = vector.shape_cast %161 : vector<1x8x128xf32> to vector<8x128xf32>
    %163 = arith.addf %159, %162 : vector<8x128xf32>
    %164 = arith.addf %163, %6 : vector<8x128xf32>
    %cst_54 = arith.constant dense<0xFF800000> : vector<8xf32>
    %165 = vector.multi_reduction <maximumf>, %164, %cst_54 [1] : vector<8x128xf32> to vector<8xf32>
    %166 = vector.shape_cast %165 : vector<8xf32> to vector<8x1xf32>
    %167 = vector.broadcast %166 : vector<8x1xf32> to vector<8x128xf32>
    %168 = arith.subf %164, %167 : vector<8x128xf32>
    %169 = math.exp %168 : vector<8x128xf32>
    %cst_55 = arith.constant dense<0.000000e+00> : vector<8xf32>
    %170 = vector.multi_reduction <add>, %169, %cst_55 [1] : vector<8x128xf32> to vector<8xf32>
    %171 = vector.shape_cast %170 : vector<8xf32> to vector<8x1xf32>
    %172 = math.log %171 : vector<8x1xf32>
    %173 = arith.addf %166, %172 : vector<8x1xf32>
    %174 = arith.addf %163, %9 : vector<8x128xf32>
    %cst_56 = arith.constant dense<0xFF800000> : vector<8xf32>
    %175 = vector.multi_reduction <maximumf>, %174, %cst_56 [1] : vector<8x128xf32> to vector<8xf32>
    %176 = vector.shape_cast %175 : vector<8xf32> to vector<8x1xf32>
    %177 = vector.broadcast %176 : vector<8x1xf32> to vector<8x128xf32>
    %178 = arith.subf %174, %177 : vector<8x128xf32>
    %179 = math.exp %178 : vector<8x128xf32>
    %cst_57 = arith.constant dense<0.000000e+00> : vector<8xf32>
    %180 = vector.multi_reduction <add>, %179, %cst_57 [1] : vector<8x128xf32> to vector<8xf32>
    %181 = vector.shape_cast %180 : vector<8xf32> to vector<8x1xf32>
    %182 = math.log %181 : vector<8x1xf32>
    %183 = arith.addf %176, %182 : vector<8x1xf32>
    %c6_i32_58 = arith.constant 6 : i32
    %184 = arith.cmpi slt, %152, %c6_i32_58 : i32
    %c1_i32_59 = arith.constant 1 : i32
    %185 = arith.addi %152, %c1_i32_59 : i32
    %186 = vector.broadcast %185 : i32 to vector<8x128xi32>
    %187 = arith.cmpi eq, %3, %186 : vector<8x128xi32>
    %188 = vector.broadcast %184 : i1 to vector<8x128xi1>
    %189 = arith.andi %188, %187 : vector<8x128xi1>
    %c1_i32_60 = arith.constant 1 : i32
    %190 = arith.addi %152, %c1_i32_60 : i32
    %191 = vector.broadcast %190 : i32 to vector<8x128xi32>
    %192 = arith.cmpi sgt, %3, %191 : vector<8x128xi32>
    %c5_i32_61 = arith.constant 5 : i32
    %193 = arith.cmpi slt, %152, %c5_i32_61 : i32
    %194 = vector.broadcast %193 : i1 to vector<8x128xi1>
    %195 = arith.andi %192, %194 : vector<8x128xi1>
    %cst_62 = arith.constant 0.000000e+00 : f32
    %196 = vector.shape_cast %183 : vector<8x1xf32> to vector<8x1xf32>
    %197 = vector.broadcast %196 : vector<8x1xf32> to vector<8x128xf32>
    %198 = vector.broadcast %cst_62 : f32 to vector<8x128xf32>
    %199 = arith.select %189, %197, %198 : vector<8x128xi1>, vector<8x128xf32>
    %200 = arith.addf %136, %199 : vector<8x128xf32>
    %cst_63 = arith.constant 0.000000e+00 : f32
    %201 = vector.shape_cast %173 : vector<8x1xf32> to vector<8x1xf32>
    %202 = vector.broadcast %201 : vector<8x1xf32> to vector<8x128xf32>
    %203 = vector.broadcast %cst_63 : f32 to vector<8x128xf32>
    %204 = arith.select %195, %202, %203 : vector<8x128xi1>, vector<8x128xf32>
    %205 = arith.addf %200, %204 : vector<8x128xf32>
    %206 = vector.broadcast %173 : vector<8x1xf32> to vector<8x128xf32>
    %207 = arith.subf %164, %206 : vector<8x128xf32>
    %cst_64 = arith.constant -6.400000e+01 : f32
    %208 = vector.broadcast %cst_64 : f32 to vector<8x128xf32>
    %209 = arith.maximumf %207, %208 : vector<8x128xf32>
    %210 = math.exp %209 : vector<8x128xf32>
    %cst_65 = arith.constant dense<0.000000e+00> : vector<8x128xf32>
    %211 = tpu.matmul %210, %10, %cst_65 {dimension_numbers = #tpu.dot_dimension_numbers<[1], [0], [0], [1], [0, 0, 1, 1], [], []>} : vector<8x128xf32>, vector<128x128xf32>, vector<8x128xf32> -> vector<8x128xf32>
    %c5_i32_66 = arith.constant 5 : i32
    %212 = arith.cmpi slt, %152, %c5_i32_66 : i32
    %213 = arith.extui %212 : i1 to i32
    %214 = arith.sitofp %213 : i32 to f32
    %215 = vector.broadcast %214 : f32 to vector<8x128xf32>
    %216 = arith.mulf %215, %211 : vector<8x128xf32>
    %cst_67 = arith.constant 1.000000e+00 : f32
    %217 = arith.subf %cst_67, %214 : f32
    %218 = vector.broadcast %217 : f32 to vector<8x128xf32>
    %219 = arith.mulf %218, %151 : vector<8x128xf32>
    %220 = arith.addf %216, %219 : vector<8x128xf32>
    %c3_i32 = arith.constant 3 : i32
    %221 = arith.addi %11, %c3_i32 : i32
    %cst_68 = arith.constant 1.60381082E-28 : f32
    %222 = vector.broadcast %cst_68 : f32 to vector<8x128xf32>
    %223 = arith.cmpf olt, %220, %222 : vector<8x128xf32>
    %cst_69 = arith.constant 1.60381082E-28 : f32
    %224 = vector.broadcast %cst_69 : f32 to vector<8x128xf32>
    %225 = arith.maximumf %220, %224 : vector<8x128xf32>
    %226 = math.log %225 : vector<8x128xf32>
    %cst_70 = arith.constant -6.400000e+01 : f32
    %227 = vector.broadcast %cst_70 : f32 to vector<8x128xf32>
    %228 = arith.select %223, %227, %226 : vector<8x128xi1>, vector<8x128xf32>
    %229 = arith.index_cast %c3_i32 : i32 to index
    %c0_71 = arith.constant 0 : index
    %c0_72 = arith.constant 0 : index
    %230 = vector.load %arg2[%229, %c0_71, %c0_72] : memref<6x8x128xf32, #tpu.memory_space<vmem>>, vector<1x8x128xf32>
    %231 = vector.shape_cast %230 : vector<1x8x128xf32> to vector<8x128xf32>
    %232 = arith.addf %228, %231 : vector<8x128xf32>
    %233 = arith.addf %232, %6 : vector<8x128xf32>
    %cst_73 = arith.constant dense<0xFF800000> : vector<8xf32>
    %234 = vector.multi_reduction <maximumf>, %233, %cst_73 [1] : vector<8x128xf32> to vector<8xf32>
    %235 = vector.shape_cast %234 : vector<8xf32> to vector<8x1xf32>
    %236 = vector.broadcast %235 : vector<8x1xf32> to vector<8x128xf32>
    %237 = arith.subf %233, %236 : vector<8x128xf32>
    %238 = math.exp %237 : vector<8x128xf32>
    %cst_74 = arith.constant dense<0.000000e+00> : vector<8xf32>
    %239 = vector.multi_reduction <add>, %238, %cst_74 [1] : vector<8x128xf32> to vector<8xf32>
    %240 = vector.shape_cast %239 : vector<8xf32> to vector<8x1xf32>
    %241 = math.log %240 : vector<8x1xf32>
    %242 = arith.addf %235, %241 : vector<8x1xf32>
    %243 = arith.addf %232, %9 : vector<8x128xf32>
    %cst_75 = arith.constant dense<0xFF800000> : vector<8xf32>
    %244 = vector.multi_reduction <maximumf>, %243, %cst_75 [1] : vector<8x128xf32> to vector<8xf32>
    %245 = vector.shape_cast %244 : vector<8xf32> to vector<8x1xf32>
    %246 = vector.broadcast %245 : vector<8x1xf32> to vector<8x128xf32>
    %247 = arith.subf %243, %246 : vector<8x128xf32>
    %248 = math.exp %247 : vector<8x128xf32>
    %cst_76 = arith.constant dense<0.000000e+00> : vector<8xf32>
    %249 = vector.multi_reduction <add>, %248, %cst_76 [1] : vector<8x128xf32> to vector<8xf32>
    %250 = vector.shape_cast %249 : vector<8xf32> to vector<8x1xf32>
    %251 = math.log %250 : vector<8x1xf32>
    %252 = arith.addf %245, %251 : vector<8x1xf32>
    %c6_i32_77 = arith.constant 6 : i32
    %253 = arith.cmpi slt, %221, %c6_i32_77 : i32
    %c1_i32_78 = arith.constant 1 : i32
    %254 = arith.addi %221, %c1_i32_78 : i32
    %255 = vector.broadcast %254 : i32 to vector<8x128xi32>
    %256 = arith.cmpi eq, %3, %255 : vector<8x128xi32>
    %257 = vector.broadcast %253 : i1 to vector<8x128xi1>
    %258 = arith.andi %257, %256 : vector<8x128xi1>
    %c1_i32_79 = arith.constant 1 : i32
    %259 = arith.addi %221, %c1_i32_79 : i32
    %260 = vector.broadcast %259 : i32 to vector<8x128xi32>
    %261 = arith.cmpi sgt, %3, %260 : vector<8x128xi32>
    %c5_i32_80 = arith.constant 5 : i32
    %262 = arith.cmpi slt, %221, %c5_i32_80 : i32
    %263 = vector.broadcast %262 : i1 to vector<8x128xi1>
    %264 = arith.andi %261, %263 : vector<8x128xi1>
    %cst_81 = arith.constant 0.000000e+00 : f32
    %265 = vector.shape_cast %252 : vector<8x1xf32> to vector<8x1xf32>
    %266 = vector.broadcast %265 : vector<8x1xf32> to vector<8x128xf32>
    %267 = vector.broadcast %cst_81 : f32 to vector<8x128xf32>
    %268 = arith.select %258, %266, %267 : vector<8x128xi1>, vector<8x128xf32>
    %269 = arith.addf %205, %268 : vector<8x128xf32>
    %cst_82 = arith.constant 0.000000e+00 : f32
    %270 = vector.shape_cast %242 : vector<8x1xf32> to vector<8x1xf32>
    %271 = vector.broadcast %270 : vector<8x1xf32> to vector<8x128xf32>
    %272 = vector.broadcast %cst_82 : f32 to vector<8x128xf32>
    %273 = arith.select %264, %271, %272 : vector<8x128xi1>, vector<8x128xf32>
    %274 = arith.addf %269, %273 : vector<8x128xf32>
    %275 = vector.broadcast %242 : vector<8x1xf32> to vector<8x128xf32>
    %276 = arith.subf %233, %275 : vector<8x128xf32>
    %cst_83 = arith.constant -6.400000e+01 : f32
    %277 = vector.broadcast %cst_83 : f32 to vector<8x128xf32>
    %278 = arith.maximumf %276, %277 : vector<8x128xf32>
    %279 = math.exp %278 : vector<8x128xf32>
    %cst_84 = arith.constant dense<0.000000e+00> : vector<8x128xf32>
    %280 = tpu.matmul %279, %10, %cst_84 {dimension_numbers = #tpu.dot_dimension_numbers<[1], [0], [0], [1], [0, 0, 1, 1], [], []>} : vector<8x128xf32>, vector<128x128xf32>, vector<8x128xf32> -> vector<8x128xf32>
    %c5_i32_85 = arith.constant 5 : i32
    %281 = arith.cmpi slt, %221, %c5_i32_85 : i32
    %282 = arith.extui %281 : i1 to i32
    %283 = arith.sitofp %282 : i32 to f32
    %284 = vector.broadcast %283 : f32 to vector<8x128xf32>
    %285 = arith.mulf %284, %280 : vector<8x128xf32>
    %cst_86 = arith.constant 1.000000e+00 : f32
    %286 = arith.subf %cst_86, %283 : f32
    %287 = vector.broadcast %286 : f32 to vector<8x128xf32>
    %288 = arith.mulf %287, %220 : vector<8x128xf32>
    %289 = arith.addf %285, %288 : vector<8x128xf32>
    %c4_i32 = arith.constant 4 : i32
    %290 = arith.addi %11, %c4_i32 : i32
    %cst_87 = arith.constant 1.60381082E-28 : f32
    %291 = vector.broadcast %cst_87 : f32 to vector<8x128xf32>
    %292 = arith.cmpf olt, %289, %291 : vector<8x128xf32>
    %cst_88 = arith.constant 1.60381082E-28 : f32
    %293 = vector.broadcast %cst_88 : f32 to vector<8x128xf32>
    %294 = arith.maximumf %289, %293 : vector<8x128xf32>
    %295 = math.log %294 : vector<8x128xf32>
    %cst_89 = arith.constant -6.400000e+01 : f32
    %296 = vector.broadcast %cst_89 : f32 to vector<8x128xf32>
    %297 = arith.select %292, %296, %295 : vector<8x128xi1>, vector<8x128xf32>
    %298 = arith.index_cast %c4_i32 : i32 to index
    %c0_90 = arith.constant 0 : index
    %c0_91 = arith.constant 0 : index
    %299 = vector.load %arg2[%298, %c0_90, %c0_91] : memref<6x8x128xf32, #tpu.memory_space<vmem>>, vector<1x8x128xf32>
    %300 = vector.shape_cast %299 : vector<1x8x128xf32> to vector<8x128xf32>
    %301 = arith.addf %297, %300 : vector<8x128xf32>
    %302 = arith.addf %301, %6 : vector<8x128xf32>
    %cst_92 = arith.constant dense<0xFF800000> : vector<8xf32>
    %303 = vector.multi_reduction <maximumf>, %302, %cst_92 [1] : vector<8x128xf32> to vector<8xf32>
    %304 = vector.shape_cast %303 : vector<8xf32> to vector<8x1xf32>
    %305 = vector.broadcast %304 : vector<8x1xf32> to vector<8x128xf32>
    %306 = arith.subf %302, %305 : vector<8x128xf32>
    %307 = math.exp %306 : vector<8x128xf32>
    %cst_93 = arith.constant dense<0.000000e+00> : vector<8xf32>
    %308 = vector.multi_reduction <add>, %307, %cst_93 [1] : vector<8x128xf32> to vector<8xf32>
    %309 = vector.shape_cast %308 : vector<8xf32> to vector<8x1xf32>
    %310 = math.log %309 : vector<8x1xf32>
    %311 = arith.addf %304, %310 : vector<8x1xf32>
    %312 = arith.addf %301, %9 : vector<8x128xf32>
    %cst_94 = arith.constant dense<0xFF800000> : vector<8xf32>
    %313 = vector.multi_reduction <maximumf>, %312, %cst_94 [1] : vector<8x128xf32> to vector<8xf32>
    %314 = vector.shape_cast %313 : vector<8xf32> to vector<8x1xf32>
    %315 = vector.broadcast %314 : vector<8x1xf32> to vector<8x128xf32>
    %316 = arith.subf %312, %315 : vector<8x128xf32>
    %317 = math.exp %316 : vector<8x128xf32>
    %cst_95 = arith.constant dense<0.000000e+00> : vector<8xf32>
    %318 = vector.multi_reduction <add>, %317, %cst_95 [1] : vector<8x128xf32> to vector<8xf32>
    %319 = vector.shape_cast %318 : vector<8xf32> to vector<8x1xf32>
    %320 = math.log %319 : vector<8x1xf32>
    %321 = arith.addf %314, %320 : vector<8x1xf32>
    %c6_i32_96 = arith.constant 6 : i32
    %322 = arith.cmpi slt, %290, %c6_i32_96 : i32
    %c1_i32_97 = arith.constant 1 : i32
    %323 = arith.addi %290, %c1_i32_97 : i32
    %324 = vector.broadcast %323 : i32 to vector<8x128xi32>
    %325 = arith.cmpi eq, %3, %324 : vector<8x128xi32>
    %326 = vector.broadcast %322 : i1 to vector<8x128xi1>
    %327 = arith.andi %326, %325 : vector<8x128xi1>
    %c1_i32_98 = arith.constant 1 : i32
    %328 = arith.addi %290, %c1_i32_98 : i32
    %329 = vector.broadcast %328 : i32 to vector<8x128xi32>
    %330 = arith.cmpi sgt, %3, %329 : vector<8x128xi32>
    %c5_i32_99 = arith.constant 5 : i32
    %331 = arith.cmpi slt, %290, %c5_i32_99 : i32
    %332 = vector.broadcast %331 : i1 to vector<8x128xi1>
    %333 = arith.andi %330, %332 : vector<8x128xi1>
    %cst_100 = arith.constant 0.000000e+00 : f32
    %334 = vector.shape_cast %321 : vector<8x1xf32> to vector<8x1xf32>
    %335 = vector.broadcast %334 : vector<8x1xf32> to vector<8x128xf32>
    %336 = vector.broadcast %cst_100 : f32 to vector<8x128xf32>
    %337 = arith.select %327, %335, %336 : vector<8x128xi1>, vector<8x128xf32>
    %338 = arith.addf %274, %337 : vector<8x128xf32>
    %cst_101 = arith.constant 0.000000e+00 : f32
    %339 = vector.shape_cast %311 : vector<8x1xf32> to vector<8x1xf32>
    %340 = vector.broadcast %339 : vector<8x1xf32> to vector<8x128xf32>
    %341 = vector.broadcast %cst_101 : f32 to vector<8x128xf32>
    %342 = arith.select %333, %340, %341 : vector<8x128xi1>, vector<8x128xf32>
    %343 = arith.addf %338, %342 : vector<8x128xf32>
    %344 = vector.broadcast %311 : vector<8x1xf32> to vector<8x128xf32>
    %345 = arith.subf %302, %344 : vector<8x128xf32>
    %cst_102 = arith.constant -6.400000e+01 : f32
    %346 = vector.broadcast %cst_102 : f32 to vector<8x128xf32>
    %347 = arith.maximumf %345, %346 : vector<8x128xf32>
    %348 = math.exp %347 : vector<8x128xf32>
    %cst_103 = arith.constant dense<0.000000e+00> : vector<8x128xf32>
    %349 = tpu.matmul %348, %10, %cst_103 {dimension_numbers = #tpu.dot_dimension_numbers<[1], [0], [0], [1], [0, 0, 1, 1], [], []>} : vector<8x128xf32>, vector<128x128xf32>, vector<8x128xf32> -> vector<8x128xf32>
    %c5_i32_104 = arith.constant 5 : i32
    %350 = arith.cmpi slt, %290, %c5_i32_104 : i32
    %351 = arith.extui %350 : i1 to i32
    %352 = arith.sitofp %351 : i32 to f32
    %353 = vector.broadcast %352 : f32 to vector<8x128xf32>
    %354 = arith.mulf %353, %349 : vector<8x128xf32>
    %cst_105 = arith.constant 1.000000e+00 : f32
    %355 = arith.subf %cst_105, %352 : f32
    %356 = vector.broadcast %355 : f32 to vector<8x128xf32>
    %357 = arith.mulf %356, %289 : vector<8x128xf32>
    %358 = arith.addf %354, %357 : vector<8x128xf32>
    %c5_i32_106 = arith.constant 5 : i32
    %359 = arith.addi %11, %c5_i32_106 : i32
    %cst_107 = arith.constant 1.60381082E-28 : f32
    %360 = vector.broadcast %cst_107 : f32 to vector<8x128xf32>
    %361 = arith.cmpf olt, %358, %360 : vector<8x128xf32>
    %cst_108 = arith.constant 1.60381082E-28 : f32
    %362 = vector.broadcast %cst_108 : f32 to vector<8x128xf32>
    %363 = arith.maximumf %358, %362 : vector<8x128xf32>
    %364 = math.log %363 : vector<8x128xf32>
    %cst_109 = arith.constant -6.400000e+01 : f32
    %365 = vector.broadcast %cst_109 : f32 to vector<8x128xf32>
    %366 = arith.select %361, %365, %364 : vector<8x128xi1>, vector<8x128xf32>
    %367 = arith.index_cast %c5_i32_106 : i32 to index
    %c0_110 = arith.constant 0 : index
    %c0_111 = arith.constant 0 : index
    %368 = vector.load %arg2[%367, %c0_110, %c0_111] : memref<6x8x128xf32, #tpu.memory_space<vmem>>, vector<1x8x128xf32>
    %369 = vector.shape_cast %368 : vector<1x8x128xf32> to vector<8x128xf32>
    %370 = arith.addf %366, %369 : vector<8x128xf32>
    %371 = arith.addf %370, %6 : vector<8x128xf32>
    %cst_112 = arith.constant dense<0xFF800000> : vector<8xf32>
    %372 = vector.multi_reduction <maximumf>, %371, %cst_112 [1] : vector<8x128xf32> to vector<8xf32>
    %373 = vector.shape_cast %372 : vector<8xf32> to vector<8x1xf32>
    %374 = vector.broadcast %373 : vector<8x1xf32> to vector<8x128xf32>
    %375 = arith.subf %371, %374 : vector<8x128xf32>
    %376 = math.exp %375 : vector<8x128xf32>
    %cst_113 = arith.constant dense<0.000000e+00> : vector<8xf32>
    %377 = vector.multi_reduction <add>, %376, %cst_113 [1] : vector<8x128xf32> to vector<8xf32>
    %378 = vector.shape_cast %377 : vector<8xf32> to vector<8x1xf32>
    %379 = math.log %378 : vector<8x1xf32>
    %380 = arith.addf %373, %379 : vector<8x1xf32>
    %381 = arith.addf %370, %9 : vector<8x128xf32>
    %cst_114 = arith.constant dense<0xFF800000> : vector<8xf32>
    %382 = vector.multi_reduction <maximumf>, %381, %cst_114 [1] : vector<8x128xf32> to vector<8xf32>
    %383 = vector.shape_cast %382 : vector<8xf32> to vector<8x1xf32>
    %384 = vector.broadcast %383 : vector<8x1xf32> to vector<8x128xf32>
    %385 = arith.subf %381, %384 : vector<8x128xf32>
    %386 = math.exp %385 : vector<8x128xf32>
    %cst_115 = arith.constant dense<0.000000e+00> : vector<8xf32>
    %387 = vector.multi_reduction <add>, %386, %cst_115 [1] : vector<8x128xf32> to vector<8xf32>
    %388 = vector.shape_cast %387 : vector<8xf32> to vector<8x1xf32>
    %389 = math.log %388 : vector<8x1xf32>
    %390 = arith.addf %383, %389 : vector<8x1xf32>
    %c6_i32_116 = arith.constant 6 : i32
    %391 = arith.cmpi slt, %359, %c6_i32_116 : i32
    %c1_i32_117 = arith.constant 1 : i32
    %392 = arith.addi %359, %c1_i32_117 : i32
    %393 = vector.broadcast %392 : i32 to vector<8x128xi32>
    %394 = arith.cmpi eq, %3, %393 : vector<8x128xi32>
    %395 = vector.broadcast %391 : i1 to vector<8x128xi1>
    %396 = arith.andi %395, %394 : vector<8x128xi1>
    %c1_i32_118 = arith.constant 1 : i32
    %397 = arith.addi %359, %c1_i32_118 : i32
    %398 = vector.broadcast %397 : i32 to vector<8x128xi32>
    %399 = arith.cmpi sgt, %3, %398 : vector<8x128xi32>
    %c5_i32_119 = arith.constant 5 : i32
    %400 = arith.cmpi slt, %359, %c5_i32_119 : i32
    %401 = vector.broadcast %400 : i1 to vector<8x128xi1>
    %402 = arith.andi %399, %401 : vector<8x128xi1>
    %cst_120 = arith.constant 0.000000e+00 : f32
    %403 = vector.shape_cast %390 : vector<8x1xf32> to vector<8x1xf32>
    %404 = vector.broadcast %403 : vector<8x1xf32> to vector<8x128xf32>
    %405 = vector.broadcast %cst_120 : f32 to vector<8x128xf32>
    %406 = arith.select %396, %404, %405 : vector<8x128xi1>, vector<8x128xf32>
    %407 = arith.addf %343, %406 : vector<8x128xf32>
    %cst_121 = arith.constant 0.000000e+00 : f32
    %408 = vector.shape_cast %380 : vector<8x1xf32> to vector<8x1xf32>
    %409 = vector.broadcast %408 : vector<8x1xf32> to vector<8x128xf32>
    %410 = vector.broadcast %cst_121 : f32 to vector<8x128xf32>
    %411 = arith.select %402, %409, %410 : vector<8x128xi1>, vector<8x128xf32>
    %412 = arith.addf %407, %411 : vector<8x128xf32>
    %413 = vector.broadcast %380 : vector<8x1xf32> to vector<8x128xf32>
    %414 = arith.subf %371, %413 : vector<8x128xf32>
    %cst_122 = arith.constant -6.400000e+01 : f32
    %415 = vector.broadcast %cst_122 : f32 to vector<8x128xf32>
    %416 = arith.maximumf %414, %415 : vector<8x128xf32>
    %417 = math.exp %416 : vector<8x128xf32>
    %cst_123 = arith.constant dense<0.000000e+00> : vector<8x128xf32>
    %418 = tpu.matmul %417, %10, %cst_123 {dimension_numbers = #tpu.dot_dimension_numbers<[1], [0], [0], [1], [0, 0, 1, 1], [], []>} : vector<8x128xf32>, vector<128x128xf32>, vector<8x128xf32> -> vector<8x128xf32>
    %c5_i32_124 = arith.constant 5 : i32
    %419 = arith.cmpi slt, %359, %c5_i32_124 : i32
    %420 = arith.extui %419 : i1 to i32
    %421 = arith.sitofp %420 : i32 to f32
    %422 = vector.broadcast %421 : f32 to vector<8x128xf32>
    %423 = arith.mulf %422, %418 : vector<8x128xf32>
    %cst_125 = arith.constant 1.000000e+00 : f32
    %424 = arith.subf %cst_125, %421 : f32
    %425 = vector.broadcast %424 : f32 to vector<8x128xf32>
    %426 = arith.mulf %425, %358 : vector<8x128xf32>
    %427 = arith.addf %423, %426 : vector<8x128xf32>
    %c6_i32_126 = arith.constant 6 : i32
    %c0_127 = arith.constant 0 : index
    %c0_128 = arith.constant 0 : index
    %428 = vector.load %arg9[%c0_127, %c0_128] : memref<8x128xf32, #tpu.memory_space<vmem>>, vector<8x128xf32>
    tpu.vector_store %arg9[%c0_127, %c0_128], %427 {strides = array<i32>} : memref<8x128xf32, #tpu.memory_space<vmem>>, vector<8x128xf32>,
    %c0_129 = arith.constant 0 : index
    %c0_130 = arith.constant 0 : index
    %429 = vector.load %arg8[%c0_129, %c0_130] : memref<8x128xf32, #tpu.memory_space<vmem>>, vector<8x128xf32>
    tpu.vector_store %arg8[%c0_129, %c0_130], %412 {strides = array<i32>} : memref<8x128xf32, #tpu.memory_space<vmem>>, vector<8x128xf32>,
    return
  }
  func.func @transform_0(%arg0: i32, %arg1: i32) -> (i32, i32, i32) {
    %c0_i32 = arith.constant 0 : i32
    %c0_i32_0 = arith.constant 0 : i32
    return %arg1, %arg0, %c0_i32 : i32, i32, i32
  }
  func.func @transform_1(%arg0: i32, %arg1: i32) -> (i32, i32) {
    %c0_i32 = arith.constant 0 : i32
    %c0_i32_0 = arith.constant 0 : i32
    return %arg0, %c0_i32 : i32, i32
  }
  func.func @transform_2(%arg0: i32, %arg1: i32) -> (i32, i32) {
    %c0_i32 = arith.constant 0 : i32
    %c0_i32_0 = arith.constant 0 : i32
    %c0_i32_1 = arith.constant 0 : i32
    return %c0_i32, %c0_i32_0 : i32, i32
  }
  func.func @transform_3(%arg0: i32, %arg1: i32) -> (i32, i32) {
    %c0_i32 = arith.constant 0 : i32
    %c0_i32_0 = arith.constant 0 : i32
    %c0_i32_1 = arith.constant 0 : i32
    return %c0_i32, %c0_i32_0 : i32, i32
  }
  func.func @transform_4(%arg0: i32, %arg1: i32) -> (i32, i32) {
    %c0_i32 = arith.constant 0 : i32
    %c0_i32_0 = arith.constant 0 : i32
    %c0_i32_1 = arith.constant 0 : i32
    return %c0_i32, %c0_i32_0 : i32, i32
  }
  func.func @transform_5(%arg0: i32, %arg1: i32) -> (i32, i32) {
    %c0_i32 = arith.constant 0 : i32
    %c0_i32_0 = arith.constant 0 : i32
    %c0_i32_1 = arith.constant 0 : i32
    return %c0_i32, %c0_i32_0 : i32, i32
  }
  func.func @transform_6(%arg0: i32, %arg1: i32) -> (i32, i32) {
    %c0_i32 = arith.constant 0 : i32
    %c0_i32_0 = arith.constant 0 : i32
    return %arg0, %c0_i32 : i32, i32
  }
}

</mosaic_0001>

<llo_original>
// kernel: tpu_custom_call.1
$region0: #{tpu_custom_call.1}
  #allocation0 [shape = 'u32[]', space=smem, size = 0x4, offset = 0x4, fixed_abs, tag = 'smem constant byte address 0x4 - core index']
  #allocation1 [shape = 'u32[72,128]{1,0:T(1,128)}', space=vmem, size = 0x9000, scoped, tag = 'internal scratch']
  #allocation2 [shape = 'f32[8,128]{1,0:T(8,128)}', space=vmem, size = 0x1000, scoped, tag = 'scratch operand']
  %s0 = inlined_call_operand.hbm [shape: f32[6,8,128], index: 0, kind: input, shape index: {}]
  %s1 = inlined_call_operand.hbm [shape: s32[8,128], index: 1, kind: input, shape index: {}]
  %s2 = inlined_call_operand.vmem [shape: f32[1,128], index: 2, kind: input, shape index: {}]
  %s3 = inlined_call_operand.vmem [shape: f32[1,128], index: 3, kind: input, shape index: {}]
  %s4 = inlined_call_operand.vmem [shape: f32[1,128], index: 4, kind: input, shape index: {}]
  %s5 = inlined_call_operand.hbm [shape: f32[128,128], index: 5, kind: input, shape index: {}]
  %s6 = inlined_call_operand.hbm [shape: f32[8,128], index: 6, kind: output, shape index: {}]
  %s7 = sld [smem:[#allocation0]]
  $region50: #{tpu_custom_call.1} parent=0
    _
  %s9 = ssub.s32 1, %s7
  %s10 = scalar_select 0, %s9, %s7
  $region1: #{tpu_custom_call.1} parent=0
    #allocation3 [shape = 'u8[24576]{0}', space=vmem, size = 0x6000, scoped, tag = 'input window, operand 0, single buffered']
    #allocation4 [shape = 's32[1]{0}', space=sflag, size = 0x4, scoped, tag = 'scoped memory for tpu_custom_call.1']
    #allocation5 [shape = 's32[1]{0}', space=sflag, size = 0x4, scoped, tag = 'scoped memory for tpu_custom_call.1']
    #allocation6 [shape = 'u8[4096]{0}', space=vmem, size = 0x1000, scoped, tag = 'input window, operand 1, single buffered']
    #allocation7 [shape = 's32[1]{0}', space=sflag, size = 0x4, scoped, tag = 'scoped memory for tpu_custom_call.1']
    #allocation8 [shape = 'u8[65536]{0}', space=vmem, size = 0x10000, scoped, tag = 'input window, operand 5, single buffered']
    #allocation9 [shape = 'u8[4096]{0}', space=vmem, size = 0x1000, scoped, tag = 'output window, operand 0, single buffered']
    %11 = vsyncpa [#allocation4], 0
    %12 = vsyncpa [#allocation7], 0
    %13 = vsyncpa [#allocation5], 0
    // Predicated region
    $region2: #{tpu_custom_call.1} parent=1 // pred_check
      _
    $region3: #{tpu_custom_call.1} parent=1 // pred_check_branch
      %15 = sbr.rel (0) target = $region5
    $region4: #{tpu_custom_call.1} parent=1 // pred_region
      %17 = vsyncadd [#allocation4], 0
      %s18 = sshll.u32 %s0, 4
      %s19 = int_to_ptr.hbm [resolvable:$true] %s18
      %s20 = sshll.u32 [#allocation3], 4
      %s21 = int_to_ptr.vmem [resolvable:$true] %s20
      %26 = dma.hbm_to_vmem [thread:$0]  %s19, 768, %s21, [#allocation4], 128, 128, 8
    $region5: #{tpu_custom_call.1} parent=1 // pred_fallthru
      _
    // Predicated region
    $region6: #{tpu_custom_call.1} parent=1 // pred_check
      _
    $region7: #{tpu_custom_call.1} parent=1 // pred_check_branch
      %28 = sbr.rel (0) target = $region9
    $region8: #{tpu_custom_call.1} parent=1 // pred_region
      %30 = vsyncadd [#allocation7], 0
      %s32 = sshll.u32 %s1, 4
      %s33 = int_to_ptr.hbm [resolvable:$true] %s32
      %s34 = sshll.u32 [#allocation6], 4
      %s35 = int_to_ptr.vmem [resolvable:$true] %s34
      %37 = dma.hbm_to_vmem [thread:$0]  %s33, 128, %s35, [#allocation7]
    $region9: #{tpu_custom_call.1} parent=1 // pred_fallthru
      _
    // Predicated region
    $region10: #{tpu_custom_call.1} parent=1 // pred_check
      _
    $region11: #{tpu_custom_call.1} parent=1 // pred_check_branch
      %39 = sbr.rel (0) target = $region13
    $region12: #{tpu_custom_call.1} parent=1 // pred_region
      _
    $region13: #{tpu_custom_call.1} parent=1 // pred_fallthru
      _
    // Predicated region
    $region14: #{tpu_custom_call.1} parent=1 // pred_check
      _
    $region15: #{tpu_custom_call.1} parent=1 // pred_check_branch
      %41 = sbr.rel (0) target = $region17
    $region16: #{tpu_custom_call.1} parent=1 // pred_region
      _
    $region17: #{tpu_custom_call.1} parent=1 // pred_fallthru
      _
    // Predicated region
    $region18: #{tpu_custom_call.1} parent=1 // pred_check
      _
    $region19: #{tpu_custom_call.1} parent=1 // pred_check_branch
      %43 = sbr.rel (0) target = $region21
    $region20: #{tpu_custom_call.1} parent=1 // pred_region
      _
    $region21: #{tpu_custom_call.1} parent=1 // pred_fallthru
      _
    // Predicated region
    $region22: #{tpu_custom_call.1} parent=1 // pred_check
      _
    $region23: #{tpu_custom_call.1} parent=1 // pred_check_branch
      %45 = sbr.rel (0) target = $region25
    $region24: #{tpu_custom_call.1} parent=1 // pred_region
      %47 = vsyncadd [#allocation7], 0
      %s48 = sshll.u32 %s5, 4
      %s49 = int_to_ptr.hbm [resolvable:$true] %s48
      %s50 = sshll.u32 [#allocation8], 4
      %s51 = int_to_ptr.vmem [resolvable:$true] %s50
      %56 = dma.hbm_to_vmem [thread:$0]  %s49, 2048, %s51, [#allocation7], 128, 128, 8
    $region25: #{tpu_custom_call.1} parent=1 // pred_fallthru
      _
    // Predicated region
    $region26: #{tpu_custom_call.1} parent=1 // pred_check
      _
    $region27: #{tpu_custom_call.1} parent=1 // pred_check_branch
      %58 = sbr.rel (0) target = $region29
    $region28: #{tpu_custom_call.1} parent=1 // pred_region
      %60 = dma.done [#allocation4], 768
    $region29: #{tpu_custom_call.1} parent=1 // pred_fallthru
      _
    // Predicated region
    $region30: #{tpu_custom_call.1} parent=1 // pred_check
      _
    $region31: #{tpu_custom_call.1} parent=1 // pred_check_branch
      %62 = sbr.rel (0) target = $region33
    $region32: #{tpu_custom_call.1} parent=1 // pred_region
      %64 = dma.done [#allocation7], 128
    $region33: #{tpu_custom_call.1} parent=1 // pred_fallthru
      _
    // Predicated region
    $region34: #{tpu_custom_call.1} parent=1 // pred_check
      _
    $region35: #{tpu_custom_call.1} parent=1 // pred_check_branch
      %66 = sbr.rel (0) target = $region37
    $region36: #{tpu_custom_call.1} parent=1 // pred_region
      %68 = dma.done [#allocation7], 2048
    $region37: #{tpu_custom_call.1} parent=1 // pred_fallthru
      _
    %p69 = scmp.eq.s32.totalorder 0, 0
    // Predicated region
    $region38: #{tpu_custom_call.1} parent=1 // pred_check
      %p70 = pneg %p69
    $region39: #{tpu_custom_call.1} parent=1 // pred_check_branch
      %72 = sbr.rel (%p70) target = $region41
    $region40: #{tpu_custom_call.1} parent=1 // pred_region
      %73 = vst [vmem:[#allocation9] sm:$0xff] 0.0
      %v74 = vld [vmem:[%s2] sm:$0x1]
      %v76 = vperm.slane %v74, 0
      %78 = vst [vmem:[#allocation2] sm:$0xff] %v76
    $region41: #{tpu_custom_call.1} parent=1 // pred_fallthru
      _
    %v79 = vld [vmem:[#allocation6] sm:$0xff]
    %v80 = vld [vmem:[%s3] sm:$0x1]
    %v82 = vperm.slane %v80, 0
    %v84 = vld [vmem:[%s4] sm:$0x1]
    %v86 = vperm.slane %v84, 0
    %v88 = vld [vmem:[#allocation8] sm:$0xff]
    %v89 = vld [vmem:[#allocation8 + $0x8] sm:$0xff]
    %v90 = vld [vmem:[#allocation8 + $0x10] sm:$0xff]
    %v91 = vld [vmem:[#allocation8 + $0x18] sm:$0xff]
    %v92 = vld [vmem:[#allocation8 + $0x20] sm:$0xff]
    %v93 = vld [vmem:[#allocation8 + $0x28] sm:$0xff]
    %v94 = vld [vmem:[#allocation8 + $0x30] sm:$0xff]
    %v95 = vld [vmem:[#allocation8 + $0x38] sm:$0xff]
    %v96 = vld [vmem:[#allocation8 + $0x40] sm:$0xff]
    %v97 = vld [vmem:[#allocation8 + $0x48] sm:$0xff]
    %v98 = vld [vmem:[#allocation8 + $0x50] sm:$0xff]
    %v99 = vld [vmem:[#allocation8 + $0x58] sm:$0xff]
    %v100 = vld [vmem:[#allocation8 + $0x60] sm:$0xff]
    %v101 = vld [vmem:[#allocation8 + $0x68] sm:$0xff]
    %v102 = vld [vmem:[#allocation8 + $0x70] sm:$0xff]
    %v103 = vld [vmem:[#allocation8 + $0x78] sm:$0xff]
    %s104 = smul.u32 0, 6
    %v105 = vld [vmem:[#allocation2] sm:$0xff]
    %v106 = vld [vmem:[#allocation9] sm:$0xff]
    %vm107 = vcmp.lt.f32.partialorder %v105, 1.6038108e-28
    %v108 = vmax.f32 %v105, 1.6038108e-28
    %v109 = vlog2.pop %v108
    %v110 = vmul.f32 %v109, 0.6931472
    %v111 = vsel %vm107, -64.0, %v110
    %v112 = vld [vmem:[#allocation3] sm:$0xff]
    %v113 = vadd.f32 %v111, %v112
    %v114 = vadd.f32 %v113, %v82
    %115 = vmax.xlane.f32.xlu0 %v114
    %v116 = vpop.xlane.xlu0 %115
    %v117 = vsub.f32 %v114, %v116
    %v118 = vmul.f32 %v117, 1.442695
    %v119 = vpow.pop %v118
    %120 = vadd.xlane.f32.xlu0 %v119
    %v121 = vpop.xlane.xlu0 %120
    %v122 = vlog2.pop %v121
    %v123 = vmul.f32 %v122, 0.6931472
    %v124 = vadd.f32 %v116, %v123
    %v125 = vadd.f32 %v113, %v86
    %126 = vmax.xlane.f32.xlu0 %v125
    %v127 = vpop.xlane.xlu0 %126
    %v128 = vsub.f32 %v125, %v127
    %v129 = vmul.f32 %v128, 1.442695
    %v130 = vpow.pop %v129
    %131 = vadd.xlane.f32.xlu0 %v130
    %v132 = vpop.xlane.xlu0 %131
    %v133 = vlog2.pop %v132
    %v134 = vmul.f32 %v133, 0.6931472
    %v135 = vadd.f32 %v127, %v134
    %p136 = scmp.lt.s32.totalorder %s104, 6
    %s137 = sadd.s32 %s104, 1
    %v138 = vstv %s137
    %vm139 = vcmp.eq.s32.totalorder %v79, %v138
    %s140 = scalar_select %p136, 1, 0
    %v141 = vstv %s140
    %vm142 = vcmp.eq.s32.totalorder %v141, 1
    %vm143 = vmand %vm142, %vm139
    %vm144 = vcmp.gt.s32.totalorder %v79, %v138
    %p145 = scmp.lt.s32.totalorder %s104, 5
    %s146 = scalar_select %p145, 1, 0
    %v147 = vstv %s146
    %vm148 = vcmp.eq.s32.totalorder %v147, 1
    %vm149 = vmand %vm144, %vm148
    %v150 = vsel %vm143, %v135, 0.0
    %v151 = vadd.f32 %v106, %v150
    %v152 = vsel %vm149, %v124, 0.0
    %v153 = vadd.f32 %v151, %v152
    %v154 = vsub.f32 %v114, %v124
    %v155 = vmax.f32 %v154, -64.0
    %v156 = vmul.f32 %v155, 1.442695
    %v157 = vpow.pop %v156
    %158 = vmatpush.msra.mxu0 %v103
    %159 = vmatpush.msra.mxu0 %v102
    %160 = vmatpush.msra.mxu0 %v101
    %161 = vmatpush.msra.mxu0 %v100
    %162 = vmatpush.msra.mxu0 %v99
    %163 = vmatpush.msra.mxu0 %v98
    %164 = vmatpush.msra.mxu0 %v97
    %165 = vmatpush.msra.mxu0 %v96
    %166 = vmatpush.msra.mxu0 %v95
    %167 = vmatpush.msra.mxu0 %v94
    %168 = vmatpush.msra.mxu0 %v93
    %169 = vmatpush.msra.mxu0 %v92
    %170 = vmatpush.msra.mxu0 %v91
    %171 = vmatpush.msra.mxu0 %v90
    %172 = vmatpush.msra.mxu0 %v89
    %173 = vmatpush.msra.mxu0 %v88
    %174 = vmatmul.f32.gmra.mxu0 %v157
    %v175 = vpop.f32.mrf.mxu0
    %v176 = vadd.f32 0.0, %v175
    %177 = vdwg.mxu0
    %s178 = scvt.s32.f32 %s146
    %v179 = vstv %s178
    %v180 = vmul.f32 %v179, %v176
    %s181 = ssub.f32 1.0, %s178
    %v182 = vstv %s181
    %v183 = vmul.f32 %v182, %v105
    %v184 = vadd.f32 %v180, %v183
    %vm185 = vcmp.lt.f32.partialorder %v184, 1.6038108e-28
    %v186 = vmax.f32 %v184, 1.6038108e-28
    %v187 = vlog2.pop %v186
    %v188 = vmul.f32 %v187, 0.6931472
    %v189 = vsel %vm185, -64.0, %v188
    %s190 = scalar_lea.vmem [#allocation3], 8
    %v191 = vld [vmem:[%s190] sm:$0xff]
    %v192 = vadd.f32 %v189, %v191
    %v193 = vadd.f32 %v192, %v82
    %194 = vmax.xlane.f32.xlu0 %v193
    %v195 = vpop.xlane.xlu0 %194
    %v196 = vsub.f32 %v193, %v195
    %v197 = vmul.f32 %v196, 1.442695
    %v198 = vpow.pop %v197
    %199 = vadd.xlane.f32.xlu0 %v198
    %v200 = vpop.xlane.xlu0 %199
    %v201 = vlog2.pop %v200
    %v202 = vmul.f32 %v201, 0.6931472
    %v203 = vadd.f32 %v195, %v202
    %v204 = vadd.f32 %v192, %v86
    %205 = vmax.xlane.f32.xlu0 %v204
    %v206 = vpop.xlane.xlu0 %205
    %v207 = vsub.f32 %v204, %v206
    %v208 = vmul.f32 %v207, 1.442695
    %v209 = vpow.pop %v208
    %210 = vadd.xlane.f32.xlu0 %v209
    %v211 = vpop.xlane.xlu0 %210
    %v212 = vlog2.pop %v211
    %v213 = vmul.f32 %v212, 0.6931472
    %v214 = vadd.f32 %v206, %v213
    %p215 = scmp.lt.s32.totalorder %s137, 6
    %s216 = sadd.s32 %s104, 2
    %v217 = vstv %s216
    %vm218 = vcmp.eq.s32.totalorder %v79, %v217
    %s219 = scalar_select %p215, 1, 0
    %v220 = vstv %s219
    %vm221 = vcmp.eq.s32.totalorder %v220, 1
    %vm222 = vmand %vm221, %vm218
    %vm223 = vcmp.gt.s32.totalorder %v79, %v217
    %p224 = scmp.lt.s32.totalorder %s137, 5
    %s225 = scalar_select %p224, 1, 0
    %v226 = vstv %s225
    %vm227 = vcmp.eq.s32.totalorder %v226, 1
    %vm228 = vmand %vm223, %vm227
    %v229 = vsel %vm222, %v214, 0.0
    %v230 = vadd.f32 %v153, %v229
    %v231 = vsel %vm228, %v203, 0.0
    %v232 = vadd.f32 %v230, %v231
    %v233 = vsub.f32 %v193, %v203
    %v234 = vmax.f32 %v233, -64.0
    %v235 = vmul.f32 %v234, 1.442695
    %v236 = vpow.pop %v235
    %237 = vmatpush.msra.mxu0 %v103
    %238 = vmatpush.msra.mxu0 %v102
    %239 = vmatpush.msra.mxu0 %v101
    %240 = vmatpush.msra.mxu0 %v100
    %241 = vmatpush.msra.mxu0 %v99
    %242 = vmatpush.msra.mxu0 %v98
    %243 = vmatpush.msra.mxu0 %v97
    %244 = vmatpush.msra.mxu0 %v96
    %245 = vmatpush.msra.mxu0 %v95
    %246 = vmatpush.msra.mxu0 %v94
    %247 = vmatpush.msra.mxu0 %v93
    %248 = vmatpush.msra.mxu0 %v92
    %249 = vmatpush.msra.mxu0 %v91
    %250 = vmatpush.msra.mxu0 %v90
    %251 = vmatpush.msra.mxu0 %v89
    %252 = vmatpush.msra.mxu0 %v88
    %253 = vmatmul.f32.gmra.mxu0 %v236
    %v254 = vpop.f32.mrf.mxu0
    %v255 = vadd.f32 0.0, %v254
    %256 = vdwg.mxu0
    %s257 = scvt.s32.f32 %s225
    %v258 = vstv %s257
    %v259 = vmul.f32 %v258, %v255
    %s260 = ssub.f32 1.0, %s257
    %v261 = vstv %s260
    %v262 = vmul.f32 %v261, %v184
    %v263 = vadd.f32 %v259, %v262
    %vm264 = vcmp.lt.f32.partialorder %v263, 1.6038108e-28
    %v265 = vmax.f32 %v263, 1.6038108e-28
    %v266 = vlog2.pop %v265
    %v267 = vmul.f32 %v266, 0.6931472
    %v268 = vsel %vm264, -64.0, %v267
    %s269 = scalar_lea.vmem [#allocation3], 16
    %v270 = vld [vmem:[%s269] sm:$0xff]
    %v271 = vadd.f32 %v268, %v270
    %v272 = vadd.f32 %v271, %v82
    %273 = vmax.xlane.f32.xlu0 %v272
    %v274 = vpop.xlane.xlu0 %273
    %v275 = vsub.f32 %v272, %v274
    %v276 = vmul.f32 %v275, 1.442695
    %v277 = vpow.pop %v276
    %278 = vadd.xlane.f32.xlu0 %v277
    %v279 = vpop.xlane.xlu0 %278
    %v280 = vlog2.pop %v279
    %v281 = vmul.f32 %v280, 0.6931472
    %v282 = vadd.f32 %v274, %v281
    %v283 = vadd.f32 %v271, %v86
    %284 = vmax.xlane.f32.xlu0 %v283
    %v285 = vpop.xlane.xlu0 %284
    %v286 = vsub.f32 %v283, %v285
    %v287 = vmul.f32 %v286, 1.442695
    %v288 = vpow.pop %v287
    %289 = vadd.xlane.f32.xlu0 %v288
    %v290 = vpop.xlane.xlu0 %289
    %v291 = vlog2.pop %v290
    %v292 = vmul.f32 %v291, 0.6931472
    %v293 = vadd.f32 %v285, %v292
    %p294 = scmp.lt.s32.totalorder %s216, 6
    %s295 = sadd.s32 %s104, 3
    %v296 = vstv %s295
    %vm297 = vcmp.eq.s32.totalorder %v79, %v296
    %s298 = scalar_select %p294, 1, 0
    %v299 = vstv %s298
    %vm300 = vcmp.eq.s32.totalorder %v299, 1
    %vm301 = vmand %vm300, %vm297
    %vm302 = vcmp.gt.s32.totalorder %v79, %v296
    %p303 = scmp.lt.s32.totalorder %s216, 5
    %s304 = scalar_select %p303, 1, 0
    %v305 = vstv %s304
    %vm306 = vcmp.eq.s32.totalorder %v305, 1
    %vm307 = vmand %vm302, %vm306
    %v308 = vsel %vm301, %v293, 0.0
    %v309 = vadd.f32 %v232, %v308
    %v310 = vsel %vm307, %v282, 0.0
    %v311 = vadd.f32 %v309, %v310
    %v312 = vsub.f32 %v272, %v282
    %v313 = vmax.f32 %v312, -64.0
    %v314 = vmul.f32 %v313, 1.442695
    %v315 = vpow.pop %v314
    %316 = vmatpush.msra.mxu0 %v103
    %317 = vmatpush.msra.mxu0 %v102
    %318 = vmatpush.msra.mxu0 %v101
    %319 = vmatpush.msra.mxu0 %v100
    %320 = vmatpush.msra.mxu0 %v99
    %321 = vmatpush.msra.mxu0 %v98
    %322 = vmatpush.msra.mxu0 %v97
    %323 = vmatpush.msra.mxu0 %v96
    %324 = vmatpush.msra.mxu0 %v95
    %325 = vmatpush.msra.mxu0 %v94
    %326 = vmatpush.msra.mxu0 %v93
    %327 = vmatpush.msra.mxu0 %v92
    %328 = vmatpush.msra.mxu0 %v91
    %329 = vmatpush.msra.mxu0 %v90
    %330 = vmatpush.msra.mxu0 %v89
    %331 = vmatpush.msra.mxu0 %v88
    %332 = vmatmul.f32.gmra.mxu0 %v315
    %v333 = vpop.f32.mrf.mxu0
    %v334 = vadd.f32 0.0, %v333
    %335 = vdwg.mxu0
    %s336 = scvt.s32.f32 %s304
    %v337 = vstv %s336
    %v338 = vmul.f32 %v337, %v334
    %s339 = ssub.f32 1.0, %s336
    %v340 = vstv %s339
    %v341 = vmul.f32 %v340, %v263
    %v342 = vadd.f32 %v338, %v341
    %vm343 = vcmp.lt.f32.partialorder %v342, 1.6038108e-28
    %v344 = vmax.f32 %v342, 1.6038108e-28
    %v345 = vlog2.pop %v344
    %v346 = vmul.f32 %v345, 0.6931472
    %v347 = vsel %vm343, -64.0, %v346
    %s348 = scalar_lea.vmem [#allocation3], 24
    %v349 = vld [vmem:[%s348] sm:$0xff]
    %v350 = vadd.f32 %v347, %v349
    %v351 = vadd.f32 %v350, %v82
    %352 = vmax.xlane.f32.xlu0 %v351
    %v353 = vpop.xlane.xlu0 %352
    %v354 = vsub.f32 %v351, %v353
    %v355 = vmul.f32 %v354, 1.442695
    %v356 = vpow.pop %v355
    %357 = vadd.xlane.f32.xlu0 %v356
    %v358 = vpop.xlane.xlu0 %357
    %v359 = vlog2.pop %v358
    %v360 = vmul.f32 %v359, 0.6931472
    %v361 = vadd.f32 %v353, %v360
    %v362 = vadd.f32 %v350, %v86
    %363 = vmax.xlane.f32.xlu0 %v362
    %v364 = vpop.xlane.xlu0 %363
    %v365 = vsub.f32 %v362, %v364
    %v366 = vmul.f32 %v365, 1.442695
    %v367 = vpow.pop %v366
    %368 = vadd.xlane.f32.xlu0 %v367
    %v369 = vpop.xlane.xlu0 %368
    %v370 = vlog2.pop %v369
    %v371 = vmul.f32 %v370, 0.6931472
    %v372 = vadd.f32 %v364, %v371
    %p373 = scmp.lt.s32.totalorder %s295, 6
    %s374 = sadd.s32 %s104, 4
    %v375 = vstv %s374
    %vm376 = vcmp.eq.s32.totalorder %v79, %v375
    %s377 = scalar_select %p373, 1, 0
    %v378 = vstv %s377
    %vm379 = vcmp.eq.s32.totalorder %v378, 1
    %vm380 = vmand %vm379, %vm376
    %vm381 = vcmp.gt.s32.totalorder %v79, %v375
    %p382 = scmp.lt.s32.totalorder %s295, 5
    %s383 = scalar_select %p382, 1, 0
    %v384 = vstv %s383
    %vm385 = vcmp.eq.s32.totalorder %v384, 1
    %vm386 = vmand %vm381, %vm385
    %v387 = vsel %vm380, %v372, 0.0
    %v388 = vadd.f32 %v311, %v387
    %v389 = vsel %vm386, %v361, 0.0
    %v390 = vadd.f32 %v388, %v389
    %v391 = vsub.f32 %v351, %v361
    %v392 = vmax.f32 %v391, -64.0
    %v393 = vmul.f32 %v392, 1.442695
    %v394 = vpow.pop %v393
    %395 = vmatpush.msra.mxu0 %v103
    %396 = vmatpush.msra.mxu0 %v102
    %397 = vmatpush.msra.mxu0 %v101
    %398 = vmatpush.msra.mxu0 %v100
    %399 = vmatpush.msra.mxu0 %v99
    %400 = vmatpush.msra.mxu0 %v98
    %401 = vmatpush.msra.mxu0 %v97
    %402 = vmatpush.msra.mxu0 %v96
    %403 = vmatpush.msra.mxu0 %v95
    %404 = vmatpush.msra.mxu0 %v94
    %405 = vmatpush.msra.mxu0 %v93
    %406 = vmatpush.msra.mxu0 %v92
    %407 = vmatpush.msra.mxu0 %v91
    %408 = vmatpush.msra.mxu0 %v90
    %409 = vmatpush.msra.mxu0 %v89
    %410 = vmatpush.msra.mxu0 %v88
    %411 = vmatmul.f32.gmra.mxu0 %v394
    %v412 = vpop.f32.mrf.mxu0
    %v413 = vadd.f32 0.0, %v412
    %414 = vdwg.mxu0
    %s415 = scvt.s32.f32 %s383
    %v416 = vstv %s415
    %v417 = vmul.f32 %v416, %v413
    %s418 = ssub.f32 1.0, %s415
    %v419 = vstv %s418
    %v420 = vmul.f32 %v419, %v342
    %v421 = vadd.f32 %v417, %v420
    %vm422 = vcmp.lt.f32.partialorder %v421, 1.6038108e-28
    %v423 = vmax.f32 %v421, 1.6038108e-28
    %v424 = vlog2.pop %v423
    %v425 = vmul.f32 %v424, 0.6931472
    %v426 = vsel %vm422, -64.0, %v425
    %s427 = scalar_lea.vmem [#allocation3], 32
    %v428 = vld [vmem:[%s427] sm:$0xff]
    %v429 = vadd.f32 %v426, %v428
    %v430 = vadd.f32 %v429, %v82
    %431 = vmax.xlane.f32.xlu0 %v430
    %v432 = vpop.xlane.xlu0 %431
    %v433 = vsub.f32 %v430, %v432
    %v434 = vmul.f32 %v433, 1.442695
    %v435 = vpow.pop %v434
    %436 = vadd.xlane.f32.xlu0 %v435
    %v437 = vpop.xlane.xlu0 %436
    %v438 = vlog2.pop %v437
    %v439 = vmul.f32 %v438, 0.6931472
    %v440 = vadd.f32 %v432, %v439
    %v441 = vadd.f32 %v429, %v86
    %442 = vmax.xlane.f32.xlu0 %v441
    %v443 = vpop.xlane.xlu0 %442
    %v444 = vsub.f32 %v441, %v443
    %v445 = vmul.f32 %v444, 1.442695
    %v446 = vpow.pop %v445
    %447 = vadd.xlane.f32.xlu0 %v446
    %v448 = vpop.xlane.xlu0 %447
    %v449 = vlog2.pop %v448
    %v450 = vmul.f32 %v449, 0.6931472
    %v451 = vadd.f32 %v443, %v450
    %p452 = scmp.lt.s32.totalorder %s374, 6
    %s453 = sadd.s32 %s104, 5
    %v454 = vstv %s453
    %vm455 = vcmp.eq.s32.totalorder %v79, %v454
    %s456 = scalar_select %p452, 1, 0
    %v457 = vstv %s456
    %vm458 = vcmp.eq.s32.totalorder %v457, 1
    %vm459 = vmand %vm458, %vm455
    %vm460 = vcmp.gt.s32.totalorder %v79, %v454
    %p461 = scmp.lt.s32.totalorder %s374, 5
    %s462 = scalar_select %p461, 1, 0
    %v463 = vstv %s462
    %vm464 = vcmp.eq.s32.totalorder %v463, 1
    %vm465 = vmand %vm460, %vm464
    %v466 = vsel %vm459, %v451, 0.0
    %v467 = vadd.f32 %v390, %v466
    %v468 = vsel %vm465, %v440, 0.0
    %v469 = vadd.f32 %v467, %v468
    %v470 = vsub.f32 %v430, %v440
    %v471 = vmax.f32 %v470, -64.0
    %v472 = vmul.f32 %v471, 1.442695
    %v473 = vpow.pop %v472
    %474 = vmatpush.msra.mxu0 %v103
    %475 = vmatpush.msra.mxu0 %v102
    %476 = vmatpush.msra.mxu0 %v101
    %477 = vmatpush.msra.mxu0 %v100
    %478 = vmatpush.msra.mxu0 %v99
    %479 = vmatpush.msra.mxu0 %v98
    %480 = vmatpush.msra.mxu0 %v97
    %481 = vmatpush.msra.mxu0 %v96
    %482 = vmatpush.msra.mxu0 %v95
    %483 = vmatpush.msra.mxu0 %v94
    %484 = vmatpush.msra.mxu0 %v93
    %485 = vmatpush.msra.mxu0 %v92
    %486 = vmatpush.msra.mxu0 %v91
    %487 = vmatpush.msra.mxu0 %v90
    %488 = vmatpush.msra.mxu0 %v89
    %489 = vmatpush.msra.mxu0 %v88
    %490 = vmatmul.f32.gmra.mxu0 %v473
    %v491 = vpop.f32.mrf.mxu0
    %v492 = vadd.f32 0.0, %v491
    %493 = vdwg.mxu0
    %s494 = scvt.s32.f32 %s462
    %v495 = vstv %s494
    %v496 = vmul.f32 %v495, %v492
    %s497 = ssub.f32 1.0, %s494
    %v498 = vstv %s497
    %v499 = vmul.f32 %v498, %v421
    %v500 = vadd.f32 %v496, %v499
    %vm501 = vcmp.lt.f32.partialorder %v500, 1.6038108e-28
    %v502 = vmax.f32 %v500, 1.6038108e-28
    %v503 = vlog2.pop %v502
    %v504 = vmul.f32 %v503, 0.6931472
    %v505 = vsel %vm501, -64.0, %v504
    %s506 = scalar_lea.vmem [#allocation3], 40
    %v507 = vld [vmem:[%s506] sm:$0xff]
    %v508 = vadd.f32 %v505, %v507
    %v509 = vadd.f32 %v508, %v82
    %510 = vmax.xlane.f32.xlu0 %v509
    %v511 = vpop.xlane.xlu0 %510
    %v512 = vsub.f32 %v509, %v511
    %v513 = vmul.f32 %v512, 1.442695
    %v514 = vpow.pop %v513
    %515 = vadd.xlane.f32.xlu0 %v514
    %v516 = vpop.xlane.xlu0 %515
    %v517 = vlog2.pop %v516
    %v518 = vmul.f32 %v517, 0.6931472
    %v519 = vadd.f32 %v511, %v518
    %v520 = vadd.f32 %v508, %v86
    %521 = vmax.xlane.f32.xlu0 %v520
    %v522 = vpop.xlane.xlu0 %521
    %v523 = vsub.f32 %v520, %v522
    %v524 = vmul.f32 %v523, 1.442695
    %v525 = vpow.pop %v524
    %526 = vadd.xlane.f32.xlu0 %v525
    %v527 = vpop.xlane.xlu0 %526
    %v528 = vlog2.pop %v527
    %v529 = vmul.f32 %v528, 0.6931472
    %v530 = vadd.f32 %v522, %v529
    %p531 = scmp.lt.s32.totalorder %s453, 6
    %s532 = sadd.s32 %s104, 6
    %v533 = vstv %s532
    %vm534 = vcmp.eq.s32.totalorder %v79, %v533
    %s535 = scalar_select %p531, 1, 0
    %v536 = vstv %s535
    %vm537 = vcmp.eq.s32.totalorder %v536, 1
    %vm538 = vmand %vm537, %vm534
    %vm539 = vcmp.gt.s32.totalorder %v79, %v533
    %p540 = scmp.lt.s32.totalorder %s453, 5
    %s541 = scalar_select %p540, 1, 0
    %v542 = vstv %s541
    %vm543 = vcmp.eq.s32.totalorder %v542, 1
    %vm544 = vmand %vm539, %vm543
    %v545 = vsel %vm538, %v530, 0.0
    %v546 = vadd.f32 %v469, %v545
    %v547 = vsel %vm544, %v519, 0.0
    %v548 = vadd.f32 %v546, %v547
    %v549 = vsub.f32 %v509, %v519
    %v550 = vmax.f32 %v549, -64.0
    %v551 = vmul.f32 %v550, 1.442695
    %v552 = vpow.pop %v551
    %553 = vmatpush.msra.mxu0 %v103
    %554 = vmatpush.msra.mxu0 %v102
    %555 = vmatpush.msra.mxu0 %v101
    %556 = vmatpush.msra.mxu0 %v100
    %557 = vmatpush.msra.mxu0 %v99
    %558 = vmatpush.msra.mxu0 %v98
    %559 = vmatpush.msra.mxu0 %v97
    %560 = vmatpush.msra.mxu0 %v96
    %561 = vmatpush.msra.mxu0 %v95
    %562 = vmatpush.msra.mxu0 %v94
    %563 = vmatpush.msra.mxu0 %v93
    %564 = vmatpush.msra.mxu0 %v92
    %565 = vmatpush.msra.mxu0 %v91
    %566 = vmatpush.msra.mxu0 %v90
    %567 = vmatpush.msra.mxu0 %v89
    %568 = vmatpush.msra.mxu0 %v88
    %569 = vmatmul.f32.gmra.mxu0 %v552
    %v570 = vpop.f32.mrf.mxu0
    %v571 = vadd.f32 0.0, %v570
    %572 = vdwg.mxu0
    %s573 = scvt.s32.f32 %s541
    %v574 = vstv %s573
    %v575 = vmul.f32 %v574, %v571
    %s576 = ssub.f32 1.0, %s573
    %v577 = vstv %s576
    %v578 = vmul.f32 %v577, %v500
    %v579 = vadd.f32 %v575, %v578
    %580 = vst [vmem:[#allocation2] sm:$0xff] %v579
    %581 = vst [vmem:[#allocation9] sm:$0xff] %v548
    // Predicated region
    $region42: #{tpu_custom_call.1} parent=1 // pred_check
      _
    $region43: #{tpu_custom_call.1} parent=1 // pred_check_branch
      %583 = sbr.rel (0) target = $region45
    $region44: #{tpu_custom_call.1} parent=1 // pred_region
      %585 = vsyncadd [#allocation5], 0
      %s587 = sshll.u32 [#allocation9], 4
      %s588 = int_to_ptr.vmem [resolvable:$true] %s587
      %s589 = sshll.u32 %s6, 4
      %s590 = int_to_ptr.hbm [resolvable:$true] %s589
      %592 = dma.vmem_to_hbm [thread:$0]  %s588, 128, %s590, [#allocation5]
    $region45: #{tpu_custom_call.1} parent=1 // pred_fallthru
      _
    // Predicated region
    $region46: #{tpu_custom_call.1} parent=1 // pred_check
      _
    $region47: #{tpu_custom_call.1} parent=1 // pred_check_branch
      %594 = sbr.rel (0) target = $region49
    $region48: #{tpu_custom_call.1} parent=1 // pred_region
      %596 = dma.done [#allocation5], 128
    $region49: #{tpu_custom_call.1} parent=1 // pred_fallthru
      _
    %597 = vsyncpa [#allocation4], 1
    %598 = vsyncpa [#allocation7], 1
    %599 = vsyncpa [#allocation5], 1

</llo_original>
